<compile_context>
chip_gen: v6e
topology: v6e:2x2x1
jax: 0.10.0
libtpu: 0.0.40
codegen_flags: <defaults>
</compile_context>

<pallas_src>
import jax
import jax.numpy as jnp
from jax.experimental import pallas as pl
from jax.experimental.pallas import tpu as pltpu


def _round_up(x, m):
    return ((x + m - 1) // m) * m


# A VMEM ceiling that is safe on every generation (v7x physical is 64 MiB per TC).
_VMEM_BUDGET_BYTES = 48 * 1024 * 1024
# Weights up to this size use the fully-resident path.
_RESIDENT_WEIGHT_BYTES = 24 * 1024 * 1024


# ---------------------------------------------------------------------------
# Path 1: weight resident in VMEM, grid only over M (the common case here).
# ---------------------------------------------------------------------------
def _linear_relu_resident_kernel(x_ref, w_ref, b_ref, o_ref):
    y = jnp.dot(x_ref[...], w_ref[...], preferred_element_type=jnp.float32)
    o_ref[...] = jnp.maximum(y + b_ref[...], 0.0).astype(o_ref.dtype)


def _linear_relu_resident(x, w_t, b2d, *, tm, vmem_limit_bytes):
    M, K = x.shape
    _, N = w_t.shape
    itemsize = x.dtype.itemsize
    cost = pl.CostEstimate(
        flops=2 * M * K * N,
        transcendentals=0,
        bytes_accessed=(M * K + K * N + N + M * N) * itemsize,
    )
    return pl.pallas_call(
        _linear_relu_resident_kernel,
        out_shape=jax.ShapeDtypeStruct((M, N), x.dtype),
        grid=(M // tm,),
        in_specs=[
            pl.BlockSpec((tm, K), lambda i: (i, 0)),   # x row-slab (streamed over M)
            pl.BlockSpec((K, N), lambda i: (0, 0)),    # weight: constant index -> resident
            pl.BlockSpec((1, N), lambda i: (0, 0)),    # bias:   constant index -> resident
        ],
        out_specs=pl.BlockSpec((tm, N), lambda i: (i, 0)),
        compiler_params=pltpu.CompilerParams(
            dimension_semantics=("parallel",),
            vmem_limit_bytes=vmem_limit_bytes,
        ),
        cost_estimate=cost,
    )(x, w_t, b2d)


# ---------------------------------------------------------------------------
# Path 2: large-weight fallback — tile (M, N, K), accumulate in f32 scratch.
# ---------------------------------------------------------------------------
def _linear_relu_tiled_kernel(x_ref, w_ref, b_ref, o_ref, acc_ref):
    k = pl.program_id(2)

    @pl.when(k == 0)
    def _():
        acc_ref[...] = jnp.zeros_like(acc_ref)

    acc_ref[...] += jnp.dot(
        x_ref[...], w_ref[...], preferred_element_type=jnp.float32
    )

    @pl.when(k == pl.num_programs(2) - 1)
    def _():
        o_ref[...] = jnp.maximum(acc_ref[...] + b_ref[...], 0.0).astype(o_ref.dtype)


def _linear_relu_tiled(x, w_t, b2d, *, tm, tn, tk, vmem_limit_bytes):
    M, K = x.shape
    _, N = w_t.shape
    itemsize = x.dtype.itemsize
    cost = pl.CostEstimate(
        flops=2 * M * K * N,
        transcendentals=0,
        bytes_accessed=(M * K * (N // tn) + K * N * (M // tm) + N + M * N) * itemsize,
    )
    return pl.pallas_call(
        _linear_relu_tiled_kernel,
        out_shape=jax.ShapeDtypeStruct((M, N), x.dtype),
        grid=(M // tm, N // tn, K // tk),
        in_specs=[
            pl.BlockSpec((tm, tk), lambda i, j, k: (i, k)),
            pl.BlockSpec((tk, tn), lambda i, j, k: (k, j)),
            pl.BlockSpec((1, tn), lambda i, j, k: (0, j)),
        ],
        out_specs=pl.BlockSpec((tm, tn), lambda i, j, k: (i, j)),
        scratch_shapes=[pltpu.VMEM((tm, tn), jnp.float32)],
        compiler_params=pltpu.CompilerParams(
            dimension_semantics=("parallel", "parallel", "arbitrary"),
            vmem_limit_bytes=vmem_limit_bytes,
        ),
        cost_estimate=cost,
    )(x, w_t, b2d)


# ---------------------------------------------------------------------------
# Public wrapper: relu(x @ w_t + b), x may have arbitrary leading dims.
# ---------------------------------------------------------------------------
def linear_relu(x, w_t, b):
    orig_shape = x.shape
    K = orig_shape[-1]
    K2, N = w_t.shape
    assert K == K2 and b.shape == (N,)

    x2d = x.reshape(-1, K)
    M = x2d.shape[0]
    itemsize = x2d.dtype.itemsize
    b2d = b.reshape(1, N)

    weight_bytes = K * N * itemsize
    if weight_bytes <= _RESIDENT_WEIGHT_BYTES:
        # Weight-resident path: big row slabs, weight DMA'd once.
        tm = min(512, _round_up(M, 8))
        Mp = _round_up(M, tm)
        xp = x2d if Mp == M else jnp.pad(x2d, ((0, Mp - M), (0, 0)))
        # Double-buffered x/out slabs + resident weight/bias, with headroom.
        footprint = (2 * tm * K + 2 * tm * N + K * N + 2 * N) * itemsize
        vmem_limit = int(min(max(2 * footprint, 32 * 1024 * 1024), _VMEM_BUDGET_BYTES))
        out = _linear_relu_resident(xp, w_t, b2d, tm=tm, vmem_limit_bytes=vmem_limit)
        out = out[:M]
    else:
        # Large-weight fallback with MXU-aligned tiles.
        tm = min(256, _round_up(M, 8))
        tn = min(512, _round_up(N, 128))
        tk = min(512, _round_up(K, 128))
        Mp, Np, Kp = _round_up(M, tm), _round_up(N, tn), _round_up(K, tk)
        xp = jnp.pad(x2d, ((0, Mp - M), (0, Kp - K))) if (Mp, Kp) != (M, K) else x2d
        wp = jnp.pad(w_t, ((0, Kp - K), (0, Np - N))) if (Kp, Np) != (K, N) else w_t
        bp = jnp.pad(b2d, ((0, 0), (0, Np - N))) if Np != N else b2d
        footprint = (2 * (tm * tk + tk * tn + tm * tn) + tm * tn + 2 * tn) * itemsize
        vmem_limit = int(min(max(2 * footprint, 32 * 1024 * 1024), _VMEM_BUDGET_BYTES))
        out = _linear_relu_tiled(
            xp, wp, bp, tm=tm, tn=tn, tk=tk, vmem_limit_bytes=vmem_limit
        )
        out = out[:M, :N]

    return out.reshape(*orig_shape[:-1], N)


class ExpandOutputClassificationPallas:
    """JAX/Pallas equivalent of the PyTorch module (deterministic init)."""

    def __init__(self, input_shape=512, output_shape=512, key=jax.random.PRNGKey(0)):
        kw, kb = jax.random.split(key)
        # Mimic nn.Linear default init: U(-1/sqrt(fan_in), 1/sqrt(fan_in)).
        bound = 1.0 / float(input_shape) ** 0.5
        # PyTorch weight is (out, in); keep it for reference checks.
        self.weight = jax.random.uniform(
            kw, (output_shape, input_shape), jnp.float32, -bound, bound
        )
        self.bias = jax.random.uniform(kb, (output_shape,), jnp.float32, -bound, bound)
        # Pre-transpose ONCE so every forward avoids an XLA transpose of the weight.
        self.w_t = jnp.asarray(self.weight.T)

    def __call__(self, x):
        return linear_relu(x, self.w_t, self.bias)


if __name__ == "__main__":
    # Module-default feature sizes (512 -> 512), small batch.
    batch, in_feat, out_feat = 8, 512, 512

    key = jax.random.PRNGKey(0)
    k_x, k_p = jax.random.split(key)
    x = jax.random.normal(k_x, (batch, in_feat), dtype=jnp.float32)

    model = ExpandOutputClassificationPallas(in_feat, out_feat, key=k_p)

    out = model(x)
    out = jax.block_until_ready(out)

    # Reference check in plain JAX (same math as torch: relu(x @ W^T + b)).
    ref = jnp.maximum(x @ model.weight.T + model.bias, 0.0)
    assert out.shape == (batch, out_feat)
    assert jnp.allclose(out, ref, atol=1e-4, rtol=1e-4)

    print("KERNEL_OK")
</pallas_src>

<mosaic_0001>
module attributes {stable_mosaic.version = 11 : i64} {
  func.func @_linear_relu_resident_kernel(%arg0: i32, %arg1: memref<8x512xf32, #tpu.memory_space<vmem>>, %arg2: memref<512x512xf32, #tpu.memory_space<vmem>>, %arg3: memref<1x512xf32, #tpu.memory_space<vmem>>, %arg4: memref<8x512xf32, #tpu.memory_space<vmem>>) attributes {dimension_semantics = [#tpu.dimension_semantics<parallel>], iteration_bounds = array<i64: 1>, scalar_prefetch = 0 : i64, scratch_operands = 0 : i64, tpu.core_type = #tpu.core_type<tc>, window_params = [{transform_indices = @transform_0, window_bounds = array<i64: 8, 512>}, {pipeline_mode = #tpu.pipeline_mode<synchronous>, transform_indices = @transform_1, window_bounds = array<i64: 512, 512>}, {pipeline_mode = #tpu.pipeline_mode<synchronous>, transform_indices = @transform_2, window_bounds = array<i64: 1, 512>}, {transform_indices = @transform_3, window_bounds = array<i64: 8, 512>}]} {
    %c0 = arith.constant 0 : index
    %c0_0 = arith.constant 0 : index
    %0 = vector.load %arg1[%c0, %c0_0] : memref<8x512xf32, #tpu.memory_space<vmem>>, vector<8x512xf32>
    %c0_1 = arith.constant 0 : index
    %c0_2 = arith.constant 0 : index
    %1 = vector.load %arg2[%c0_1, %c0_2] : memref<512x512xf32, #tpu.memory_space<vmem>>, vector<512x512xf32>
    %cst = arith.constant dense<0.000000e+00> : vector<8x512xf32>
    %2 = tpu.matmul %0, %1, %cst {dimension_numbers = #tpu.dot_dimension_numbers<[1], [0], [0], [1], [0, 0, 1, 1], [], []>} : vector<8x512xf32>, vector<512x512xf32>, vector<8x512xf32> -> vector<8x512xf32>
    %c0_3 = arith.constant 0 : index
    %c0_4 = arith.constant 0 : index
    %3 = vector.load %arg3[%c0_3, %c0_4] : memref<1x512xf32, #tpu.memory_space<vmem>>, vector<1x512xf32>
    %4 = vector.broadcast %3 : vector<1x512xf32> to vector<8x512xf32>
    %5 = arith.addf %2, %4 : vector<8x512xf32>
    %cst_5 = arith.constant 0.000000e+00 : f32
    %6 = vector.broadcast %cst_5 : f32 to vector<8x512xf32>
    %7 = arith.maximumf %5, %6 : vector<8x512xf32>
    %c0_6 = arith.constant 0 : index
    %c0_7 = arith.constant 0 : index
    %8 = vector.load %arg4[%c0_6, %c0_7] : memref<8x512xf32, #tpu.memory_space<vmem>>, vector<8x512xf32>
    tpu.vector_store %arg4[%c0_6, %c0_7], %7 {strides = array<i32>} : memref<8x512xf32, #tpu.memory_space<vmem>>, vector<8x512xf32>,
    return
  }
  func.func @transform_0(%arg0: i32) -> (i32, i32) {
    %c0_i32 = arith.constant 0 : i32
    %c0_i32_0 = arith.constant 0 : i32
    return %arg0, %c0_i32 : i32, i32
  }
  func.func @transform_1(%arg0: i32) -> (i32, i32) {
    %c0_i32 = arith.constant 0 : i32
    %c0_i32_0 = arith.constant 0 : i32
    %c0_i32_1 = arith.constant 0 : i32
    return %c0_i32, %c0_i32_0 : i32, i32
  }
  func.func @transform_2(%arg0: i32) -> (i32, i32) {
    %c0_i32 = arith.constant 0 : i32
    %c0_i32_0 = arith.constant 0 : i32
    %c0_i32_1 = arith.constant 0 : i32
    return %c0_i32, %c0_i32_0 : i32, i32
  }
  func.func @transform_3(%arg0: i32) -> (i32, i32) {
    %c0_i32 = arith.constant 0 : i32
    %c0_i32_0 = arith.constant 0 : i32
    return %arg0, %c0_i32 : i32, i32
  }
}

</mosaic_0001>

<llo_original>
// kernel: tpu_custom_call.1
$region0: #{tpu_custom_call.1}
  #allocation0 [shape = 'u32[]', space=smem, size = 0x4, offset = 0x4, fixed_abs, tag = 'smem constant byte address 0x4 - core index']
  #allocation1 [shape = 'u32[144,128]{1,0:T(1,128)}', space=vmem, size = 0x12000, scoped, tag = 'internal scratch']
  %s0 = inlined_call_operand.hbm [shape: f32[8,512], index: 0, kind: input, shape index: {}]
  %s1 = inlined_call_operand.hbm [shape: f32[512,512], index: 1, kind: input, shape index: {}]
  %s2 = inlined_call_operand.hbm [shape: f32[1,512], index: 2, kind: input, shape index: {}]
  %s3 = inlined_call_operand.hbm [shape: f32[8,512], index: 3, kind: output, shape index: {}]
  %s4 = sld [smem:[#allocation0]]
  $region34: #{tpu_custom_call.1} parent=0
    _
  %s6 = ssub.s32 1, %s4
  %s7 = scalar_select 0, %s6, %s4
  $region1: #{tpu_custom_call.1} parent=0
    #allocation2 [shape = 'u8[16384]{0}', space=vmem, size = 0x4000, scoped, tag = 'input window, operand 0, single buffered']
    #allocation3 [shape = 's32[1]{0}', space=sflag, size = 0x4, scoped, tag = 'scoped memory for tpu_custom_call.1']
    #allocation4 [shape = 's32[1]{0}', space=sflag, size = 0x4, scoped, tag = 'scoped memory for tpu_custom_call.1']
    #allocation5 [shape = 'u8[1048576]{0}', space=vmem, size = 0x100000, scoped, tag = 'input window, operand 1, single buffered']
    #allocation6 [shape = 's32[1]{0}', space=sflag, size = 0x4, scoped, tag = 'scoped memory for tpu_custom_call.1']
    #allocation7 [shape = 'u8[2048]{0}', space=vmem, size = 0x800, scoped, tag = 'input window, operand 2, single buffered']
    #allocation8 [shape = 'u8[16384]{0}', space=vmem, size = 0x4000, scoped, tag = 'output window, operand 0, single buffered']
    %8 = vsyncpa [#allocation3], 0
    %9 = vsyncpa [#allocation6], 0
    %10 = vsyncpa [#allocation4], 0
    // Predicated region
    $region2: #{tpu_custom_call.1} parent=1 // pred_check
      _
    $region3: #{tpu_custom_call.1} parent=1 // pred_check_branch
      %12 = sbr.rel (0) target = $region5
    $region4: #{tpu_custom_call.1} parent=1 // pred_region
      %s14 = ssub.s32 512, 512
      %15 = vsyncadd [#allocation3], %s14
      %s17 = sshll.u32 [#allocation2], 4
      %s18 = int_to_ptr.vmem [resolvable:$true] %s17
      %20 = dma.hbm_to_vmem [thread:$0]  %s0, 512, %s18, [#allocation3]
    $region5: #{tpu_custom_call.1} parent=1 // pred_fallthru
      _
    // Predicated region
    $region6: #{tpu_custom_call.1} parent=1 // pred_check
      _
    $region7: #{tpu_custom_call.1} parent=1 // pred_check_branch
      %22 = sbr.rel (0) target = $region9
    $region8: #{tpu_custom_call.1} parent=1 // pred_region
      %s24 = ssub.s32 32768, 32768
      %25 = vsyncadd [#allocation6], %s24
      %s26 = sshll.u32 [#allocation5], 4
      %s27 = int_to_ptr.vmem [resolvable:$true] %s26
      %32 = dma.hbm_to_vmem [thread:$0]  %s1, 32768, %s27, [#allocation6], 512, 512, 32
    $region9: #{tpu_custom_call.1} parent=1 // pred_fallthru
      _
    // Predicated region
    $region10: #{tpu_custom_call.1} parent=1 // pred_check
      _
    $region11: #{tpu_custom_call.1} parent=1 // pred_check_branch
      %34 = sbr.rel (0) target = $region13
    $region12: #{tpu_custom_call.1} parent=1 // pred_region
      %s36 = ssub.s32 64, 64
      %37 = vsyncadd [#allocation6], %s36
      %s39 = sshll.u32 [#allocation7], 4
      %s40 = int_to_ptr.vmem [resolvable:$true] %s39
      %42 = dma.hbm_to_vmem [thread:$0]  %s2, 64, %s40, [#allocation6]
    $region13: #{tpu_custom_call.1} parent=1 // pred_fallthru
      _
    // Predicated region
    $region14: #{tpu_custom_call.1} parent=1 // pred_check
      _
    $region15: #{tpu_custom_call.1} parent=1 // pred_check_branch
      %44 = sbr.rel (0) target = $region17
    $region16: #{tpu_custom_call.1} parent=1 // pred_region
      %45 = dma.done [#allocation3], 512
    $region17: #{tpu_custom_call.1} parent=1 // pred_fallthru
      _
    // Predicated region
    $region18: #{tpu_custom_call.1} parent=1 // pred_check
      _
    $region19: #{tpu_custom_call.1} parent=1 // pred_check_branch
      %47 = sbr.rel (0) target = $region21
    $region20: #{tpu_custom_call.1} parent=1 // pred_region
      %48 = dma.done [#allocation6], 32768
    $region21: #{tpu_custom_call.1} parent=1 // pred_fallthru
      _
    // Predicated region
    $region22: #{tpu_custom_call.1} parent=1 // pred_check
      _
    $region23: #{tpu_custom_call.1} parent=1 // pred_check_branch
      %50 = sbr.rel (0) target = $region25
    $region24: #{tpu_custom_call.1} parent=1 // pred_region
      %51 = dma.done [#allocation6], 64
    $region25: #{tpu_custom_call.1} parent=1 // pred_fallthru
      _
    %v52 = vld [vmem:[#allocation2] sm:$0xff]
    %v53 = vld [vmem:[#allocation2 + $0x8] sm:$0xff]
    %v54 = vld [vmem:[#allocation2 + $0x10] sm:$0xff]
    %v55 = vld [vmem:[#allocation2 + $0x18] sm:$0xff]
    %v56 = vld [vmem:[#allocation5] sm:$0xff]
    %v57 = vld [vmem:[#allocation5 + $0x8] sm:$0xff]
    %v58 = vld [vmem:[#allocation5 + $0x10] sm:$0xff]
    %v59 = vld [vmem:[#allocation5 + $0x18] sm:$0xff]
    %v60 = vld [vmem:[#allocation5 + $0x20] sm:$0xff]
    %v61 = vld [vmem:[#allocation5 + $0x28] sm:$0xff]
    %v62 = vld [vmem:[#allocation5 + $0x30] sm:$0xff]
    %v63 = vld [vmem:[#allocation5 + $0x38] sm:$0xff]
    %v64 = vld [vmem:[#allocation5 + $0x40] sm:$0xff]
    %v65 = vld [vmem:[#allocation5 + $0x48] sm:$0xff]
    %v66 = vld [vmem:[#allocation5 + $0x50] sm:$0xff]
    %v67 = vld [vmem:[#allocation5 + $0x58] sm:$0xff]
    %v68 = vld [vmem:[#allocation5 + $0x60] sm:$0xff]
    %v69 = vld [vmem:[#allocation5 + $0x68] sm:$0xff]
    %v70 = vld [vmem:[#allocation5 + $0x70] sm:$0xff]
    %v71 = vld [vmem:[#allocation5 + $0x78] sm:$0xff]
    %v72 = vld [vmem:[#allocation5 + $0x80] sm:$0xff]
    %v73 = vld [vmem:[#allocation5 + $0x88] sm:$0xff]
    %v74 = vld [vmem:[#allocation5 + $0x90] sm:$0xff]
    %v75 = vld [vmem:[#allocation5 + $0x98] sm:$0xff]
    %v76 = vld [vmem:[#allocation5 + $0xa0] sm:$0xff]
    %v77 = vld [vmem:[#allocation5 + $0xa8] sm:$0xff]
    %v78 = vld [vmem:[#allocation5 + $0xb0] sm:$0xff]
    %v79 = vld [vmem:[#allocation5 + $0xb8] sm:$0xff]
    %v80 = vld [vmem:[#allocation5 + $0xc0] sm:$0xff]
    %v81 = vld [vmem:[#allocation5 + $0xc8] sm:$0xff]
    %v82 = vld [vmem:[#allocation5 + $0xd0] sm:$0xff]
    %v83 = vld [vmem:[#allocation5 + $0xd8] sm:$0xff]
    %v84 = vld [vmem:[#allocation5 + $0xe0] sm:$0xff]
    %v85 = vld [vmem:[#allocation5 + $0xe8] sm:$0xff]
    %v86 = vld [vmem:[#allocation5 + $0xf0] sm:$0xff]
    %v87 = vld [vmem:[#allocation5 + $0xf8] sm:$0xff]
    %v88 = vld [vmem:[#allocation5 + $0x100] sm:$0xff]
    %v89 = vld [vmem:[#allocation5 + $0x108] sm:$0xff]
    %v90 = vld [vmem:[#allocation5 + $0x110] sm:$0xff]
    %v91 = vld [vmem:[#allocation5 + $0x118] sm:$0xff]
    %v92 = vld [vmem:[#allocation5 + $0x120] sm:$0xff]
    %v93 = vld [vmem:[#allocation5 + $0x128] sm:$0xff]
    %v94 = vld [vmem:[#allocation5 + $0x130] sm:$0xff]
    %v95 = vld [vmem:[#allocation5 + $0x138] sm:$0xff]
    %v96 = vld [vmem:[#allocation5 + $0x140] sm:$0xff]
    %v97 = vld [vmem:[#allocation5 + $0x148] sm:$0xff]
    %v98 = vld [vmem:[#allocation5 + $0x150] sm:$0xff]
    %v99 = vld [vmem:[#allocation5 + $0x158] sm:$0xff]
    %v100 = vld [vmem:[#allocation5 + $0x160] sm:$0xff]
    %v101 = vld [vmem:[#allocation5 + $0x168] sm:$0xff]
    %v102 = vld [vmem:[#allocation5 + $0x170] sm:$0xff]
    %v103 = vld [vmem:[#allocation5 + $0x178] sm:$0xff]
    %v104 = vld [vmem:[#allocation5 + $0x180] sm:$0xff]
    %v105 = vld [vmem:[#allocation5 + $0x188] sm:$0xff]
    %v106 = vld [vmem:[#allocation5 + $0x190] sm:$0xff]
    %v107 = vld [vmem:[#allocation5 + $0x198] sm:$0xff]
    %v108 = vld [vmem:[#allocation5 + $0x1a0] sm:$0xff]
    %v109 = vld [vmem:[#allocation5 + $0x1a8] sm:$0xff]
    %v110 = vld [vmem:[#allocation5 + $0x1b0] sm:$0xff]
    %v111 = vld [vmem:[#allocation5 + $0x1b8] sm:$0xff]
    %v112 = vld [vmem:[#allocation5 + $0x1c0] sm:$0xff]
    %v113 = vld [vmem:[#allocation5 + $0x1c8] sm:$0xff]
    %v114 = vld [vmem:[#allocation5 + $0x1d0] sm:$0xff]
    %v115 = vld [vmem:[#allocation5 + $0x1d8] sm:$0xff]
    %v116 = vld [vmem:[#allocation5 + $0x1e0] sm:$0xff]
    %v117 = vld [vmem:[#allocation5 + $0x1e8] sm:$0xff]
    %v118 = vld [vmem:[#allocation5 + $0x1f0] sm:$0xff]
    %v119 = vld [vmem:[#allocation5 + $0x1f8] sm:$0xff]
    %v120 = vld [vmem:[#allocation5 + $0x200] sm:$0xff]
    %v121 = vld [vmem:[#allocation5 + $0x208] sm:$0xff]
    %v122 = vld [vmem:[#allocation5 + $0x210] sm:$0xff]
    %v123 = vld [vmem:[#allocation5 + $0x218] sm:$0xff]
    %v124 = vld [vmem:[#allocation5 + $0x220] sm:$0xff]
    %v125 = vld [vmem:[#allocation5 + $0x228] sm:$0xff]
    %v126 = vld [vmem:[#allocation5 + $0x230] sm:$0xff]
    %v127 = vld [vmem:[#allocation5 + $0x238] sm:$0xff]
    %v128 = vld [vmem:[#allocation5 + $0x240] sm:$0xff]
    %v129 = vld [vmem:[#allocation5 + $0x248] sm:$0xff]
    %v130 = vld [vmem:[#allocation5 + $0x250] sm:$0xff]
    %v131 = vld [vmem:[#allocation5 + $0x258] sm:$0xff]
    %v132 = vld [vmem:[#allocation5 + $0x260] sm:$0xff]
    %v133 = vld [vmem:[#allocation5 + $0x268] sm:$0xff]
    %v134 = vld [vmem:[#allocation5 + $0x270] sm:$0xff]
    %v135 = vld [vmem:[#allocation5 + $0x278] sm:$0xff]
    %v136 = vld [vmem:[#allocation5 + $0x280] sm:$0xff]
    %v137 = vld [vmem:[#allocation5 + $0x288] sm:$0xff]
    %v138 = vld [vmem:[#allocation5 + $0x290] sm:$0xff]
    %v139 = vld [vmem:[#allocation5 + $0x298] sm:$0xff]
    %v140 = vld [vmem:[#allocation5 + $0x2a0] sm:$0xff]
    %v141 = vld [vmem:[#allocation5 + $0x2a8] sm:$0xff]
    %v142 = vld [vmem:[#allocation5 + $0x2b0] sm:$0xff]
    %v143 = vld [vmem:[#allocation5 + $0x2b8] sm:$0xff]
    %v144 = vld [vmem:[#allocation5 + $0x2c0] sm:$0xff]
    %v145 = vld [vmem:[#allocation5 + $0x2c8] sm:$0xff]
    %v146 = vld [vmem:[#allocation5 + $0x2d0] sm:$0xff]
    %v147 = vld [vmem:[#allocation5 + $0x2d8] sm:$0xff]
    %v148 = vld [vmem:[#allocation5 + $0x2e0] sm:$0xff]
    %v149 = vld [vmem:[#allocation5 + $0x2e8] sm:$0xff]
    %v150 = vld [vmem:[#allocation5 + $0x2f0] sm:$0xff]
    %v151 = vld [vmem:[#allocation5 + $0x2f8] sm:$0xff]
    %v152 = vld [vmem:[#allocation5 + $0x300] sm:$0xff]
    %v153 = vld [vmem:[#allocation5 + $0x308] sm:$0xff]
    %v154 = vld [vmem:[#allocation5 + $0x310] sm:$0xff]
    %v155 = vld [vmem:[#allocation5 + $0x318] sm:$0xff]
    %v156 = vld [vmem:[#allocation5 + $0x320] sm:$0xff]
    %v157 = vld [vmem:[#allocation5 + $0x328] sm:$0xff]
    %v158 = vld [vmem:[#allocation5 + $0x330] sm:$0xff]
    %v159 = vld [vmem:[#allocation5 + $0x338] sm:$0xff]
    %v160 = vld [vmem:[#allocation5 + $0x340] sm:$0xff]
    %v161 = vld [vmem:[#allocation5 + $0x348] sm:$0xff]
    %v162 = vld [vmem:[#allocation5 + $0x350] sm:$0xff]
    %v163 = vld [vmem:[#allocation5 + $0x358] sm:$0xff]
    %v164 = vld [vmem:[#allocation5 + $0x360] sm:$0xff]
    %v165 = vld [vmem:[#allocation5 + $0x368] sm:$0xff]
    %v166 = vld [vmem:[#allocation5 + $0x370] sm:$0xff]
    %v167 = vld [vmem:[#allocation5 + $0x378] sm:$0xff]
    %v168 = vld [vmem:[#allocation5 + $0x380] sm:$0xff]
    %v169 = vld [vmem:[#allocation5 + $0x388] sm:$0xff]
    %v170 = vld [vmem:[#allocation5 + $0x390] sm:$0xff]
    %v171 = vld [vmem:[#allocation5 + $0x398] sm:$0xff]
    %v172 = vld [vmem:[#allocation5 + $0x3a0] sm:$0xff]
    %v173 = vld [vmem:[#allocation5 + $0x3a8] sm:$0xff]
    %v174 = vld [vmem:[#allocation5 + $0x3b0] sm:$0xff]
    %v175 = vld [vmem:[#allocation5 + $0x3b8] sm:$0xff]
    %v176 = vld [vmem:[#allocation5 + $0x3c0] sm:$0xff]
    %v177 = vld [vmem:[#allocation5 + $0x3c8] sm:$0xff]
    %v178 = vld [vmem:[#allocation5 + $0x3d0] sm:$0xff]
    %v179 = vld [vmem:[#allocation5 + $0x3d8] sm:$0xff]
    %v180 = vld [vmem:[#allocation5 + $0x3e0] sm:$0xff]
    %v181 = vld [vmem:[#allocation5 + $0x3e8] sm:$0xff]
    %v182 = vld [vmem:[#allocation5 + $0x3f0] sm:$0xff]
    %v183 = vld [vmem:[#allocation5 + $0x3f8] sm:$0xff]
    %v184 = vld [vmem:[#allocation5 + $0x400] sm:$0xff]
    %v185 = vld [vmem:[#allocation5 + $0x408] sm:$0xff]
    %v186 = vld [vmem:[#allocation5 + $0x410] sm:$0xff]
    %v187 = vld [vmem:[#allocation5 + $0x418] sm:$0xff]
    %v188 = vld [vmem:[#allocation5 + $0x420] sm:$0xff]
    %v189 = vld [vmem:[#allocation5 + $0x428] sm:$0xff]
    %v190 = vld [vmem:[#allocation5 + $0x430] sm:$0xff]
    %v191 = vld [vmem:[#allocation5 + $0x438] sm:$0xff]
    %v192 = vld [vmem:[#allocation5 + $0x440] sm:$0xff]
    %v193 = vld [vmem:[#allocation5 + $0x448] sm:$0xff]
    %v194 = vld [vmem:[#allocation5 + $0x450] sm:$0xff]
    %v195 = vld [vmem:[#allocation5 + $0x458] sm:$0xff]
    %v196 = vld [vmem:[#allocation5 + $0x460] sm:$0xff]
    %v197 = vld [vmem:[#allocation5 + $0x468] sm:$0xff]
    %v198 = vld [vmem:[#allocation5 + $0x470] sm:$0xff]
    %v199 = vld [vmem:[#allocation5 + $0x478] sm:$0xff]
    %v200 = vld [vmem:[#allocation5 + $0x480] sm:$0xff]
    %v201 = vld [vmem:[#allocation5 + $0x488] sm:$0xff]
    %v202 = vld [vmem:[#allocation5 + $0x490] sm:$0xff]
    %v203 = vld [vmem:[#allocation5 + $0x498] sm:$0xff]
    %v204 = vld [vmem:[#allocation5 + $0x4a0] sm:$0xff]
    %v205 = vld [vmem:[#allocation5 + $0x4a8] sm:$0xff]
    %v206 = vld [vmem:[#allocation5 + $0x4b0] sm:$0xff]
    %v207 = vld [vmem:[#allocation5 + $0x4b8] sm:$0xff]
    %v208 = vld [vmem:[#allocation5 + $0x4c0] sm:$0xff]
    %v209 = vld [vmem:[#allocation5 + $0x4c8] sm:$0xff]
    %v210 = vld [vmem:[#allocation5 + $0x4d0] sm:$0xff]
    %v211 = vld [vmem:[#allocation5 + $0x4d8] sm:$0xff]
    %v212 = vld [vmem:[#allocation5 + $0x4e0] sm:$0xff]
    %v213 = vld [vmem:[#allocation5 + $0x4e8] sm:$0xff]
    %v214 = vld [vmem:[#allocation5 + $0x4f0] sm:$0xff]
    %v215 = vld [vmem:[#allocation5 + $0x4f8] sm:$0xff]
    %v216 = vld [vmem:[#allocation5 + $0x500] sm:$0xff]
    %v217 = vld [vmem:[#allocation5 + $0x508] sm:$0xff]
    %v218 = vld [vmem:[#allocation5 + $0x510] sm:$0xff]
    %v219 = vld [vmem:[#allocation5 + $0x518] sm:$0xff]
    %v220 = vld [vmem:[#allocation5 + $0x520] sm:$0xff]
    %v221 = vld [vmem:[#allocation5 + $0x528] sm:$0xff]
    %v222 = vld [vmem:[#allocation5 + $0x530] sm:$0xff]
    %v223 = vld [vmem:[#allocation5 + $0x538] sm:$0xff]
    %v224 = vld [vmem:[#allocation5 + $0x540] sm:$0xff]
    %v225 = vld [vmem:[#allocation5 + $0x548] sm:$0xff]
    %v226 = vld [vmem:[#allocation5 + $0x550] sm:$0xff]
    %v227 = vld [vmem:[#allocation5 + $0x558] sm:$0xff]
    %v228 = vld [vmem:[#allocation5 + $0x560] sm:$0xff]
    %v229 = vld [vmem:[#allocation5 + $0x568] sm:$0xff]
    %v230 = vld [vmem:[#allocation5 + $0x570] sm:$0xff]
    %v231 = vld [vmem:[#allocation5 + $0x578] sm:$0xff]
    %v232 = vld [vmem:[#allocation5 + $0x580] sm:$0xff]
    %v233 = vld [vmem:[#allocation5 + $0x588] sm:$0xff]
    %v234 = vld [vmem:[#allocation5 + $0x590] sm:$0xff]
    %v235 = vld [vmem:[#allocation5 + $0x598] sm:$0xff]
    %v236 = vld [vmem:[#allocation5 + $0x5a0] sm:$0xff]
    %v237 = vld [vmem:[#allocation5 + $0x5a8] sm:$0xff]
    %v238 = vld [vmem:[#allocation5 + $0x5b0] sm:$0xff]
    %v239 = vld [vmem:[#allocation5 + $0x5b8] sm:$0xff]
    %v240 = vld [vmem:[#allocation5 + $0x5c0] sm:$0xff]
    %v241 = vld [vmem:[#allocation5 + $0x5c8] sm:$0xff]
    %v242 = vld [vmem:[#allocation5 + $0x5d0] sm:$0xff]
    %v243 = vld [vmem:[#allocation5 + $0x5d8] sm:$0xff]
    %v244 = vld [vmem:[#allocation5 + $0x5e0] sm:$0xff]
    %v245 = vld [vmem:[#allocation5 + $0x5e8] sm:$0xff]
    %v246 = vld [vmem:[#allocation5 + $0x5f0] sm:$0xff]
    %v247 = vld [vmem:[#allocation5 + $0x5f8] sm:$0xff]
    %v248 = vld [vmem:[#allocation5 + $0x600] sm:$0xff]
    %v249 = vld [vmem:[#allocation5 + $0x608] sm:$0xff]
    %v250 = vld [vmem:[#allocation5 + $0x610] sm:$0xff]
    %v251 = vld [vmem:[#allocation5 + $0x618] sm:$0xff]
    %v252 = vld [vmem:[#allocation5 + $0x620] sm:$0xff]
    %v253 = vld [vmem:[#allocation5 + $0x628] sm:$0xff]
    %v254 = vld [vmem:[#allocation5 + $0x630] sm:$0xff]
    %v255 = vld [vmem:[#allocation5 + $0x638] sm:$0xff]
    %v256 = vld [vmem:[#allocation5 + $0x640] sm:$0xff]
    %v257 = vld [vmem:[#allocation5 + $0x648] sm:$0xff]
    %v258 = vld [vmem:[#allocation5 + $0x650] sm:$0xff]
    %v259 = vld [vmem:[#allocation5 + $0x658] sm:$0xff]
    %v260 = vld [vmem:[#allocation5 + $0x660] sm:$0xff]
    %v261 = vld [vmem:[#allocation5 + $0x668] sm:$0xff]
    %v262 = vld [vmem:[#allocation5 + $0x670] sm:$0xff]
    %v263 = vld [vmem:[#allocation5 + $0x678] sm:$0xff]
    %v264 = vld [vmem:[#allocation5 + $0x680] sm:$0xff]
    %v265 = vld [vmem:[#allocation5 + $0x688] sm:$0xff]
    %v266 = vld [vmem:[#allocation5 + $0x690] sm:$0xff]
    %v267 = vld [vmem:[#allocation5 + $0x698] sm:$0xff]
    %v268 = vld [vmem:[#allocation5 + $0x6a0] sm:$0xff]
    %v269 = vld [vmem:[#allocation5 + $0x6a8] sm:$0xff]
    %v270 = vld [vmem:[#allocation5 + $0x6b0] sm:$0xff]
    %v271 = vld [vmem:[#allocation5 + $0x6b8] sm:$0xff]
    %v272 = vld [vmem:[#allocation5 + $0x6c0] sm:$0xff]
    %v273 = vld [vmem:[#allocation5 + $0x6c8] sm:$0xff]
    %v274 = vld [vmem:[#allocation5 + $0x6d0] sm:$0xff]
    %v275 = vld [vmem:[#allocation5 + $0x6d8] sm:$0xff]
    %v276 = vld [vmem:[#allocation5 + $0x6e0] sm:$0xff]
    %v277 = vld [vmem:[#allocation5 + $0x6e8] sm:$0xff]
    %v278 = vld [vmem:[#allocation5 + $0x6f0] sm:$0xff]
    %v279 = vld [vmem:[#allocation5 + $0x6f8] sm:$0xff]
    %v280 = vld [vmem:[#allocation5 + $0x700] sm:$0xff]
    %v281 = vld [vmem:[#allocation5 + $0x708] sm:$0xff]
    %v282 = vld [vmem:[#allocation5 + $0x710] sm:$0xff]
    %v283 = vld [vmem:[#allocation5 + $0x718] sm:$0xff]
    %v284 = vld [vmem:[#allocation5 + $0x720] sm:$0xff]
    %v285 = vld [vmem:[#allocation5 + $0x728] sm:$0xff]
    %v286 = vld [vmem:[#allocation5 + $0x730] sm:$0xff]
    %v287 = vld [vmem:[#allocation5 + $0x738] sm:$0xff]
    %v288 = vld [vmem:[#allocation5 + $0x740] sm:$0xff]
    %v289 = vld [vmem:[#allocation5 + $0x748] sm:$0xff]
    %v290 = vld [vmem:[#allocation5 + $0x750] sm:$0xff]
    %v291 = vld [vmem:[#allocation5 + $0x758] sm:$0xff]
    %v292 = vld [vmem:[#allocation5 + $0x760] sm:$0xff]
    %v293 = vld [vmem:[#allocation5 + $0x768] sm:$0xff]
    %v294 = vld [vmem:[#allocation5 + $0x770] sm:$0xff]
    %v295 = vld [vmem:[#allocation5 + $0x778] sm:$0xff]
    %v296 = vld [vmem:[#allocation5 + $0x780] sm:$0xff]
    %v297 = vld [vmem:[#allocation5 + $0x788] sm:$0xff]
    %v298 = vld [vmem:[#allocation5 + $0x790] sm:$0xff]
    %v299 = vld [vmem:[#allocation5 + $0x798] sm:$0xff]
    %v300 = vld [vmem:[#allocation5 + $0x7a0] sm:$0xff]
    %v301 = vld [vmem:[#allocation5 + $0x7a8] sm:$0xff]
    %v302 = vld [vmem:[#allocation5 + $0x7b0] sm:$0xff]
    %v303 = vld [vmem:[#allocation5 + $0x7b8] sm:$0xff]
    %v304 = vld [vmem:[#allocation5 + $0x7c0] sm:$0xff]
    %v305 = vld [vmem:[#allocation5 + $0x7c8] sm:$0xff]
    %v306 = vld [vmem:[#allocation5 + $0x7d0] sm:$0xff]
    %v307 = vld [vmem:[#allocation5 + $0x7d8] sm:$0xff]
    %v308 = vld [vmem:[#allocation5 + $0x7e0] sm:$0xff]
    %v309 = vld [vmem:[#allocation5 + $0x7e8] sm:$0xff]
    %v310 = vld [vmem:[#allocation5 + $0x7f0] sm:$0xff]
    %v311 = vld [vmem:[#allocation5 + $0x7f8] sm:$0xff]
    %v312 = vld [vmem:[#allocation7] sm:$0xf]
    %v314 = vlaneseq
    %v315 = vshrl.u32 %v314, 7
    %v316 = vsub.s32 0, %v315
    %v317 = vrot.slane %v312, %v316
    %v318 = vlaneseq
    %v319 = vshrl.u32 %v318, 7
    %v320 = vsub.s32 1, %v319
    %v321 = vrot.slane %v312, %v320
    %v322 = vlaneseq
    %v323 = vshrl.u32 %v322, 7
    %v324 = vsub.s32 2, %v323
    %v325 = vrot.slane %v312, %v324
    %v326 = vlaneseq
    %v327 = vshrl.u32 %v326, 7
    %v328 = vsub.s32 3, %v327
    %v329 = vrot.slane %v312, %v328
    %334 = vmatprep.subr.mxu0 %v117
    %335 = vmatpush1.msra.mxu0 %v116
    %336 = vmatprep.subr.mxu0 %v113
    %337 = vmatpush1.msra.mxu0 %v112
    %338 = vmatprep.subr.mxu0 %v109
    %339 = vmatpush1.msra.mxu0 %v108
    %340 = vmatprep.subr.mxu0 %v105
    %341 = vmatpush1.msra.mxu0 %v104
    %342 = vmatprep.subr.mxu0 %v101
    %343 = vmatpush1.msra.mxu0 %v100
    %344 = vmatprep.subr.mxu0 %v97
    %345 = vmatpush1.msra.mxu0 %v96
    %346 = vmatprep.subr.mxu0 %v93
    %347 = vmatpush1.msra.mxu0 %v92
    %348 = vmatprep.subr.mxu0 %v89
    %349 = vmatpush1.msra.mxu0 %v88
    %350 = vmatprep.subr.mxu0 %v85
    %351 = vmatpush1.msra.mxu0 %v84
    %352 = vmatprep.subr.mxu0 %v81
    %353 = vmatpush1.msra.mxu0 %v80
    %354 = vmatprep.subr.mxu0 %v77
    %355 = vmatpush1.msra.mxu0 %v76
    %356 = vmatprep.subr.mxu0 %v73
    %357 = vmatpush1.msra.mxu0 %v72
    %358 = vmatprep.subr.mxu0 %v69
    %359 = vmatpush1.msra.mxu0 %v68
    %360 = vmatprep.subr.mxu0 %v65
    %361 = vmatpush1.msra.mxu0 %v64
    %362 = vmatprep.subr.mxu0 %v61
    %363 = vmatpush1.msra.mxu0 %v60
    %364 = vmatprep.subr.mxu0 %v57
    %365 = vmatpush1.msra.mxu0 %v56
    %366 = vmatprep.subr.mxu0 %v181
    %367 = vmatpush2.msra.mxu0 %v180
    %368 = vmatprep.subr.mxu0 %v177
    %369 = vmatpush2.msra.mxu0 %v176
    %370 = vmatprep.subr.mxu0 %v173
    %371 = vmatpush2.msra.mxu0 %v172
    %372 = vmatprep.subr.mxu0 %v169
    %373 = vmatpush2.msra.mxu0 %v168
    %374 = vmatprep.subr.mxu0 %v165
    %375 = vmatpush2.msra.mxu0 %v164
    %376 = vmatprep.subr.mxu0 %v161
    %377 = vmatpush2.msra.mxu0 %v160
    %378 = vmatprep.subr.mxu0 %v157
    %379 = vmatpush2.msra.mxu0 %v156
    %380 = vmatprep.subr.mxu0 %v153
    %381 = vmatpush2.msra.mxu0 %v152
    %382 = vmatprep.subr.mxu0 %v149
    %383 = vmatpush2.msra.mxu0 %v148
    %384 = vmatprep.subr.mxu0 %v145
    %385 = vmatpush2.msra.mxu0 %v144
    %386 = vmatprep.subr.mxu0 %v141
    %387 = vmatpush2.msra.mxu0 %v140
    %388 = vmatprep.subr.mxu0 %v137
    %389 = vmatpush2.msra.mxu0 %v136
    %390 = vmatprep.subr.mxu0 %v133
    %391 = vmatpush2.msra.mxu0 %v132
    %392 = vmatprep.subr.mxu0 %v129
    %393 = vmatpush2.msra.mxu0 %v128
    %394 = vmatprep.subr.mxu0 %v125
    %395 = vmatpush2.msra.mxu0 %v124
    %396 = vmatprep.subr.mxu0 %v121
    %397 = vmatpush2.msra.mxu0 %v120
    %398 = vmatprep.mubr.f32.mxu0 %v53
    %399 = vmatmul.mubr.f32.gmra.mxu0 %v52
    %v400 = vpop.f32.mrf.mxu0
    %v401 = vadd.f32 %v317, %v400
    %v402 = vpop.f32.mrf.mxu0
    %v403 = vadd.f32 %v321, %v402
    %404 = vdwg.mxu0
    %405 = vmatprep.subr.mxu0 %v245
    %406 = vmatpush1.msra.mxu0 %v244
    %407 = vmatprep.subr.mxu0 %v241
    %408 = vmatpush1.msra.mxu0 %v240
    %409 = vmatprep.subr.mxu0 %v237
    %410 = vmatpush1.msra.mxu0 %v236
    %411 = vmatprep.subr.mxu0 %v233
    %412 = vmatpush1.msra.mxu0 %v232
    %413 = vmatprep.subr.mxu0 %v229
    %414 = vmatpush1.msra.mxu0 %v228
    %415 = vmatprep.subr.mxu0 %v225
    %416 = vmatpush1.msra.mxu0 %v224
    %417 = vmatprep.subr.mxu0 %v221
    %418 = vmatpush1.msra.mxu0 %v220
    %419 = vmatprep.subr.mxu0 %v217
    %420 = vmatpush1.msra.mxu0 %v216
    %421 = vmatprep.subr.mxu0 %v213
    %422 = vmatpush1.msra.mxu0 %v212
    %423 = vmatprep.subr.mxu0 %v209
    %424 = vmatpush1.msra.mxu0 %v208
    %425 = vmatprep.subr.mxu0 %v205
    %426 = vmatpush1.msra.mxu0 %v204
    %427 = vmatprep.subr.mxu0 %v201
    %428 = vmatpush1.msra.mxu0 %v200
    %429 = vmatprep.subr.mxu0 %v197
    %430 = vmatpush1.msra.mxu0 %v196
    %431 = vmatprep.subr.mxu0 %v193
    %432 = vmatpush1.msra.mxu0 %v192
    %433 = vmatprep.subr.mxu0 %v189
    %434 = vmatpush1.msra.mxu0 %v188
    %435 = vmatprep.subr.mxu0 %v185
    %436 = vmatpush1.msra.mxu0 %v184
    %437 = vmatprep.subr.mxu0 %v309
    %438 = vmatpush2.msra.mxu0 %v308
    %439 = vmatprep.subr.mxu0 %v305
    %440 = vmatpush2.msra.mxu0 %v304
    %441 = vmatprep.subr.mxu0 %v301
    %442 = vmatpush2.msra.mxu0 %v300
    %443 = vmatprep.subr.mxu0 %v297
    %444 = vmatpush2.msra.mxu0 %v296
    %445 = vmatprep.subr.mxu0 %v293
    %446 = vmatpush2.msra.mxu0 %v292
    %447 = vmatprep.subr.mxu0 %v289
    %448 = vmatpush2.msra.mxu0 %v288
    %449 = vmatprep.subr.mxu0 %v285
    %450 = vmatpush2.msra.mxu0 %v284
    %451 = vmatprep.subr.mxu0 %v281
    %452 = vmatpush2.msra.mxu0 %v280
    %453 = vmatprep.subr.mxu0 %v277
    %454 = vmatpush2.msra.mxu0 %v276
    %455 = vmatprep.subr.mxu0 %v273
    %456 = vmatpush2.msra.mxu0 %v272
    %457 = vmatprep.subr.mxu0 %v269
    %458 = vmatpush2.msra.mxu0 %v268
    %459 = vmatprep.subr.mxu0 %v265
    %460 = vmatpush2.msra.mxu0 %v264
    %461 = vmatprep.subr.mxu0 %v261
    %462 = vmatpush2.msra.mxu0 %v260
    %463 = vmatprep.subr.mxu0 %v257
    %464 = vmatpush2.msra.mxu0 %v256
    %465 = vmatprep.subr.mxu0 %v253
    %466 = vmatpush2.msra.mxu0 %v252
    %467 = vmatprep.subr.mxu0 %v249
    %468 = vmatpush2.msra.mxu0 %v248
    %469 = vmatprep.mubr.f32.mxu0 %v55
    %470 = vmatmul.mubr.f32.gmra.mxu0 %v54
    %v471 = vpop.f32.mrf.mxu0
    %v472 = vadd.f32 %v401, %v471
    %v473 = vpop.f32.mrf.mxu0
    %v474 = vadd.f32 %v403, %v473
    %475 = vdwg.mxu0
    %476 = vmatprep.subr.mxu0 %v119
    %477 = vmatpush1.msra.mxu0 %v118
    %478 = vmatprep.subr.mxu0 %v115
    %479 = vmatpush1.msra.mxu0 %v114
    %480 = vmatprep.subr.mxu0 %v111
    %481 = vmatpush1.msra.mxu0 %v110
    %482 = vmatprep.subr.mxu0 %v107
    %483 = vmatpush1.msra.mxu0 %v106
    %484 = vmatprep.subr.mxu0 %v103
    %485 = vmatpush1.msra.mxu0 %v102
    %486 = vmatprep.subr.mxu0 %v99
    %487 = vmatpush1.msra.mxu0 %v98
    %488 = vmatprep.subr.mxu0 %v95
    %489 = vmatpush1.msra.mxu0 %v94
    %490 = vmatprep.subr.mxu0 %v91
    %491 = vmatpush1.msra.mxu0 %v90
    %492 = vmatprep.subr.mxu0 %v87
    %493 = vmatpush1.msra.mxu0 %v86
    %494 = vmatprep.subr.mxu0 %v83
    %495 = vmatpush1.msra.mxu0 %v82
    %496 = vmatprep.subr.mxu0 %v79
    %497 = vmatpush1.msra.mxu0 %v78
    %498 = vmatprep.subr.mxu0 %v75
    %499 = vmatpush1.msra.mxu0 %v74
    %500 = vmatprep.subr.mxu0 %v71
    %501 = vmatpush1.msra.mxu0 %v70
    %502 = vmatprep.subr.mxu0 %v67
    %503 = vmatpush1.msra.mxu0 %v66
    %504 = vmatprep.subr.mxu0 %v63
    %505 = vmatpush1.msra.mxu0 %v62
    %506 = vmatprep.subr.mxu0 %v59
    %507 = vmatpush1.msra.mxu0 %v58
    %508 = vmatprep.subr.mxu0 %v183
    %509 = vmatpush2.msra.mxu0 %v182
    %510 = vmatprep.subr.mxu0 %v179
    %511 = vmatpush2.msra.mxu0 %v178
    %512 = vmatprep.subr.mxu0 %v175
    %513 = vmatpush2.msra.mxu0 %v174
    %514 = vmatprep.subr.mxu0 %v171
    %515 = vmatpush2.msra.mxu0 %v170
    %516 = vmatprep.subr.mxu0 %v167
    %517 = vmatpush2.msra.mxu0 %v166
    %518 = vmatprep.subr.mxu0 %v163
    %519 = vmatpush2.msra.mxu0 %v162
    %520 = vmatprep.subr.mxu0 %v159
    %521 = vmatpush2.msra.mxu0 %v158
    %522 = vmatprep.subr.mxu0 %v155
    %523 = vmatpush2.msra.mxu0 %v154
    %524 = vmatprep.subr.mxu0 %v151
    %525 = vmatpush2.msra.mxu0 %v150
    %526 = vmatprep.subr.mxu0 %v147
    %527 = vmatpush2.msra.mxu0 %v146
    %528 = vmatprep.subr.mxu0 %v143
    %529 = vmatpush2.msra.mxu0 %v142
    %530 = vmatprep.subr.mxu0 %v139
    %531 = vmatpush2.msra.mxu0 %v138
    %532 = vmatprep.subr.mxu0 %v135
    %533 = vmatpush2.msra.mxu0 %v134
    %534 = vmatprep.subr.mxu0 %v131
    %535 = vmatpush2.msra.mxu0 %v130
    %536 = vmatprep.subr.mxu0 %v127
    %537 = vmatpush2.msra.mxu0 %v126
    %538 = vmatprep.subr.mxu0 %v123
    %539 = vmatpush2.msra.mxu0 %v122
    %540 = vmatprep.mubr.f32.mxu0 %v53
    %541 = vmatmul.mubr.f32.gmra.mxu0 %v52
    %v542 = vpop.f32.mrf.mxu0
    %v543 = vadd.f32 %v325, %v542
    %v544 = vpop.f32.mrf.mxu0
    %v545 = vadd.f32 %v329, %v544
    %546 = vdwg.mxu0
    %547 = vmatprep.subr.mxu0 %v247
    %548 = vmatpush1.msra.mxu0 %v246
    %549 = vmatprep.subr.mxu0 %v243
    %550 = vmatpush1.msra.mxu0 %v242
    %551 = vmatprep.subr.mxu0 %v239
    %552 = vmatpush1.msra.mxu0 %v238
    %553 = vmatprep.subr.mxu0 %v235
    %554 = vmatpush1.msra.mxu0 %v234
    %555 = vmatprep.subr.mxu0 %v231
    %556 = vmatpush1.msra.mxu0 %v230
    %557 = vmatprep.subr.mxu0 %v227
    %558 = vmatpush1.msra.mxu0 %v226
    %559 = vmatprep.subr.mxu0 %v223
    %560 = vmatpush1.msra.mxu0 %v222
    %561 = vmatprep.subr.mxu0 %v219
    %562 = vmatpush1.msra.mxu0 %v218
    %563 = vmatprep.subr.mxu0 %v215
    %564 = vmatpush1.msra.mxu0 %v214
    %565 = vmatprep.subr.mxu0 %v211
    %566 = vmatpush1.msra.mxu0 %v210
    %567 = vmatprep.subr.mxu0 %v207
    %568 = vmatpush1.msra.mxu0 %v206
    %569 = vmatprep.subr.mxu0 %v203
    %570 = vmatpush1.msra.mxu0 %v202
    %571 = vmatprep.subr.mxu0 %v199
    %572 = vmatpush1.msra.mxu0 %v198
    %573 = vmatprep.subr.mxu0 %v195
    %574 = vmatpush1.msra.mxu0 %v194
    %575 = vmatprep.subr.mxu0 %v191
    %576 = vmatpush1.msra.mxu0 %v190
    %577 = vmatprep.subr.mxu0 %v187
    %578 = vmatpush1.msra.mxu0 %v186
    %579 = vmatprep.subr.mxu0 %v311
    %580 = vmatpush2.msra.mxu0 %v310
    %581 = vmatprep.subr.mxu0 %v307
    %582 = vmatpush2.msra.mxu0 %v306
    %583 = vmatprep.subr.mxu0 %v303
    %584 = vmatpush2.msra.mxu0 %v302
    %585 = vmatprep.subr.mxu0 %v299
    %586 = vmatpush2.msra.mxu0 %v298
    %587 = vmatprep.subr.mxu0 %v295
    %588 = vmatpush2.msra.mxu0 %v294
    %589 = vmatprep.subr.mxu0 %v291
    %590 = vmatpush2.msra.mxu0 %v290
    %591 = vmatprep.subr.mxu0 %v287
    %592 = vmatpush2.msra.mxu0 %v286
    %593 = vmatprep.subr.mxu0 %v283
    %594 = vmatpush2.msra.mxu0 %v282
    %595 = vmatprep.subr.mxu0 %v279
    %596 = vmatpush2.msra.mxu0 %v278
    %597 = vmatprep.subr.mxu0 %v275
    %598 = vmatpush2.msra.mxu0 %v274
    %599 = vmatprep.subr.mxu0 %v271
    %600 = vmatpush2.msra.mxu0 %v270
    %601 = vmatprep.subr.mxu0 %v267
    %602 = vmatpush2.msra.mxu0 %v266
    %603 = vmatprep.subr.mxu0 %v263
    %604 = vmatpush2.msra.mxu0 %v262
    %605 = vmatprep.subr.mxu0 %v259
    %606 = vmatpush2.msra.mxu0 %v258
    %607 = vmatprep.subr.mxu0 %v255
    %608 = vmatpush2.msra.mxu0 %v254
    %609 = vmatprep.subr.mxu0 %v251
    %610 = vmatpush2.msra.mxu0 %v250
    %611 = vmatprep.mubr.f32.mxu0 %v55
    %612 = vmatmul.mubr.f32.gmra.mxu0 %v54
    %v613 = vpop.f32.mrf.mxu0
    %v614 = vadd.f32 %v543, %v613
    %v615 = vpop.f32.mrf.mxu0
    %v616 = vadd.f32 %v545, %v615
    %617 = vdwg.mxu0
    %v618 = vmax.f32 %v472, 0.0
    %v619 = vmax.f32 %v474, 0.0
    %v620 = vmax.f32 %v614, 0.0
    %v621 = vmax.f32 %v616, 0.0
    %622 = vst [vmem:[#allocation8] sm:$0xff] %v618
    %623 = vst [vmem:[#allocation8 + $0x8] sm:$0xff] %v619
    %624 = vst [vmem:[#allocation8 + $0x10] sm:$0xff] %v620
    %625 = vst [vmem:[#allocation8 + $0x18] sm:$0xff] %v621
    // Predicated region
    $region26: #{tpu_custom_call.1} parent=1 // pred_check
      _
    $region27: #{tpu_custom_call.1} parent=1 // pred_check_branch
      %627 = sbr.rel (0) target = $region29
    $region28: #{tpu_custom_call.1} parent=1 // pred_region
      %s629 = ssub.s32 512, 512
      %630 = vsyncadd [#allocation4], %s629
      %s632 = sshll.u32 [#allocation8], 4
      %s633 = int_to_ptr.vmem [resolvable:$true] %s632
      %635 = dma.vmem_to_hbm [thread:$0]  %s633, 512, %s3, [#allocation4]
    $region29: #{tpu_custom_call.1} parent=1 // pred_fallthru
      _
    // Predicated region
    $region30: #{tpu_custom_call.1} parent=1 // pred_check
      _
    $region31: #{tpu_custom_call.1} parent=1 // pred_check_branch
      %637 = sbr.rel (0) target = $region33
    $region32: #{tpu_custom_call.1} parent=1 // pred_region
      %638 = dma.done [#allocation4], 512
    $region33: #{tpu_custom_call.1} parent=1 // pred_fallthru
      _
    %639 = vsyncpa [#allocation3], 1
    %640 = vsyncpa [#allocation6], 1
    %641 = vsyncpa [#allocation4], 1

</llo_original>
